<compile_context>
chip_gen: v6e
topology: v6e:2x2x1
jax: 0.10.0
libtpu: 0.0.40
codegen_flags: <defaults>
</compile_context>

<pallas_src>
import math

import jax
import jax.numpy as jnp
from jax import lax
from jax.experimental import pallas as pl
from jax.experimental.pallas import tpu as pltpu


VMEM_TILE_BUDGET = 46 << 20  # keep tiles inside v7x's 64 MiB physical VMEM


def _round_up(v, m):
    return ((v + m - 1) // m) * m


# ---------------------------------------------------------------------------
# Kernel factory: bias / accumulator / weight-layout variants share one body.
# ---------------------------------------------------------------------------
def _make_linear_kernel(has_bias, direct_acc, w_transposed):
    # Contraction over K:
    #   w_transposed=False : x (tm, tk) . w (tn, tk)^T  (PyTorch (N, K) layout)
    #   w_transposed=True  : x (tm, tk) . w (tk, tn)    (canonical MXU form)
    dn = (((1,), (0,)), ((), ())) if w_transposed else (((1,), (1,)), ((), ()))

    def kernel(*refs):
        if direct_acc:
            if has_bias:
                x_ref, w_ref, b_ref, o_ref = refs
            else:
                x_ref, w_ref, o_ref = refs
            acc_ref = o_ref  # f32 output: accumulate straight into o_ref
        else:
            if has_bias:
                x_ref, w_ref, b_ref, o_ref, acc_ref = refs
            else:
                x_ref, w_ref, o_ref, acc_ref = refs

        k = pl.program_id(2)

        @pl.when(k == 0)
        def _():
            acc_ref[...] = jnp.zeros_like(acc_ref)

        acc_ref[...] += lax.dot_general(
            x_ref[...], w_ref[...],
            dimension_numbers=dn,
            preferred_element_type=jnp.float32,
        )

        if has_bias or not direct_acc:
            @pl.when(k == pl.num_programs(2) - 1)
            def _():
                if direct_acc:
                    o_ref[...] += b_ref[...].astype(o_ref.dtype)
                else:
                    r = acc_ref[...]
                    if has_bias:
                        r = r + b_ref[...].astype(jnp.float32)
                    o_ref[...] = r.astype(o_ref.dtype)

    return kernel


# ---------------------------------------------------------------------------
# One-time weight preparation (persistent cast + pre-transpose).
# ---------------------------------------------------------------------------
def prepare_weight(weight, *, dtype=jnp.bfloat16, transpose=True):
    """Prepare the PyTorch (out_features, in_features) weight for the fast path.

    Casts to a narrow MXU dtype (bf16 by default; f32 accumulation is kept in
    the kernel) and pre-transposes to (in_features, out_features) so the kernel
    runs the canonical (tm,tk)x(tk,tn) contraction with no per-tile transpose.
    Call ONCE at init/load time and reuse the result every step -- a per-call
    cast/transpose in the wrapper would add a full N*K f32 HBM pass per call.
    Pass the result to `linear_forward(..., weight_layout="kn")`.
    """
    w = weight if dtype is None else weight.astype(dtype)
    return jnp.transpose(w) if transpose else w


# ---------------------------------------------------------------------------
# Forward wrapper.
# ---------------------------------------------------------------------------
def linear_forward(x, weight, bias=None, *, weight_layout="nk",
                   tm=512, tn=512, tk=1024, out_dtype=None,
                   weight_buffers=None):
    """Pallas nn.Linear forward: y = x @ W^T + b.

    x:      (..., in_features)
    weight: (out_features, in_features) if weight_layout == "nk" (PyTorch), or
            (in_features, out_features) if weight_layout == "kn" (see
            `prepare_weight` for the recommended persistent bf16 fast path).
    bias:   (out_features,) or None.
    The MXU compute dtype follows weight.dtype; accumulation is float32.
    """
    if weight_layout == "nk":
        N, K = weight.shape
    elif weight_layout == "kn":
        K, N = weight.shape
    else:
        raise ValueError(f"bad weight_layout: {weight_layout}")
    w_transposed = (weight_layout == "kn")

    lead_shape = x.shape[:-1]
    assert x.shape[-1] == K, (x.shape, weight.shape)
    M = int(math.prod(lead_shape)) if lead_shape else 1
    out_dtype = jnp.dtype(x.dtype if out_dtype is None else out_dtype)

    compute_dtype = weight.dtype  # weight storage dtype drives the MXU path
    x2d = x.reshape(M, K)
    if x2d.dtype != compute_dtype:
        # Activation-only cast (small); weight must already be in its compute
        # dtype -- see prepare_weight() for the one-time persistent cast.
        x2d = x2d.astype(compute_dtype)
    w2d = weight

    in_itemsize = jnp.dtype(compute_dtype).itemsize
    out_itemsize = out_dtype.itemsize

    # ---- tile selection ------------------------------------------------------
    # Shrink requested tiles until double-buffered operands + output + acc fit
    # the v7x-safe VMEM budget (f32 mega-tiles tuned on v6e's 128 MiB must not
    # carry over to v7x's 64 MiB).
    def _tiles_bytes(tm_, tn_, tk_):
        return ((2 * tm_ * tk_ + 3 * tn_ * tk_) * in_itemsize
                + 2 * tm_ * tn_ * out_itemsize + tm_ * tn_ * 4)

    while _tiles_bytes(tm, tn, tk) > VMEM_TILE_BUDGET:
        if tk > 512:
            tk //= 2
        elif tn > 256:
            tn //= 2
        elif tm > 256:
            tm //= 2
        else:
            break

    # M / N: no padding. Partial boundary blocks are fine -- garbage rows/cols
    # only produce garbage in output rows/cols that are never written back.
    tm_e = M if M <= tm else tm
    tn_e = N if N <= tn else tn

    # K: prefer a tile that divides K exactly (no pad); otherwise zero-pad K
    # (required for correctness of the reduction).
    pad_k = False
    if K <= tk:
        tk_e = K
    else:
        tk_e = 0
        t = (tk // 128) * 128
        while t >= 128:
            if K % t == 0:
                tk_e = t
                break
            t -= 128
        if tk_e == 0:
            tk_e = tk
            pad_k = True

    Kp = _round_up(K, tk_e) if pad_k else K
    if pad_k:
        # TODO(synk): rare path (K not a multiple of 128); costs one extra HBM
        # pass over x / w. Prefer shapes with K % 128 == 0.
        x2d = jnp.pad(x2d, ((0, 0), (0, Kp - K)))
        if w_transposed:
            w2d = jnp.pad(w2d, ((0, Kp - K), (0, 0)))
        else:
            w2d = jnp.pad(w2d, ((0, 0), (0, Kp - K)))

    grid_m = pl.cdiv(M, tm_e)
    grid_n = pl.cdiv(N, tn_e)
    grid_k = Kp // tk_e

    # Megacore coverage for skinny (GEMV-like) shapes: if the whole problem is
    # one (i, j) block, split N so both v7x TensorCores get parallel work.
    if grid_m == 1 and grid_n == 1 and N >= 256:
        tn_e = _round_up(pl.cdiv(N, 2), 128)
        grid_n = pl.cdiv(N, tn_e)

    has_bias = bias is not None
    direct_acc = (out_dtype == jnp.dtype(jnp.float32))

    # Deepen the weight stream for small-M / many-k (HBM-bound, esp. v5e).
    if weight_buffers is None:
        weight_buffers = 3 if (grid_m == 1 and grid_k >= 4) else 2

    # ---- specs ---------------------------------------------------------------
    x_spec = pl.BlockSpec((tm_e, tk_e), lambda i, j, k: (i, k))
    if w_transposed:
        w_block, w_idx = (tk_e, tn_e), (lambda i, j, k: (k, j))
    else:
        w_block, w_idx = (tn_e, tk_e), (lambda i, j, k: (j, k))
    if weight_buffers != 2:
        w_spec = pl.BlockSpec(w_block, w_idx,
                              pipeline_mode=pl.Buffered(weight_buffers))
    else:
        w_spec = pl.BlockSpec(w_block, w_idx)
    o_spec = pl.BlockSpec((tm_e, tn_e), lambda i, j, k: (i, j))

    in_specs = [x_spec, w_spec]
    operands = [x2d, w2d]
    if has_bias:
        b2d = bias.reshape(1, N).astype(jnp.float32)
        in_specs.append(pl.BlockSpec((1, tn_e), lambda i, j, k: (0, j)))
        operands.append(b2d)

    scratch = [] if direct_acc else [pltpu.VMEM((tm_e, tn_e), jnp.float32)]

    # ---- VMEM limit & cost hint ------------------------------------------------
    vmem_needed = ((2 * tm_e * tk_e + weight_buffers * tn_e * tk_e) * in_itemsize
                   + 2 * tm_e * tn_e * out_itemsize
                   + (0 if direct_acc else tm_e * tn_e * 4)
                   + (2 * tn_e * 4 if has_bias else 0))
    vmem_limit = int(min(max(vmem_needed + (8 << 20), 32 << 20), 100 << 20))

    cost = pl.CostEstimate(
        flops=2 * M * N * Kp,
        transcendentals=0,
        bytes_accessed=int(
            grid_n * M * Kp * in_itemsize      # x re-read once per j block
            + grid_m * N * Kp * in_itemsize    # w re-read once per i block
            + M * N * out_itemsize
        ),
    )

    kernel = _make_linear_kernel(has_bias, direct_acc, w_transposed)

    y = pl.pallas_call(
        kernel,
        out_shape=jax.ShapeDtypeStruct((M, N), out_dtype),
        grid_spec=pltpu.PrefetchScalarGridSpec(
            num_scalar_prefetch=0,
            grid=(grid_m, grid_n, grid_k),
            in_specs=in_specs,
            out_specs=o_spec,
            scratch_shapes=scratch,
        ),
        compiler_params=pltpu.CompilerParams(
            dimension_semantics=("parallel", "parallel", "arbitrary"),
            vmem_limit_bytes=vmem_limit,
        ),
        cost_estimate=cost,
    )(*operands)

    return y.reshape(*lead_shape, N)


# ---------------------------------------------------------------------------
# Parameter init mirroring the PyTorch module.
# ---------------------------------------------------------------------------
def init_linear_params(key, in_features, out_features, bias=True, init_gain="linear"):
    """weight: xavier_uniform_ with gain = calculate_gain('linear') = 1.0
       bias:   nn.Linear default  U(-1/sqrt(fan_in), 1/sqrt(fan_in))"""
    k_w, k_b = jax.random.split(key)
    gain = 1.0  # calculate_gain('linear')
    bound_w = gain * (6.0 / (in_features + out_features)) ** 0.5
    weight = jax.random.uniform(
        k_w, (out_features, in_features), jnp.float32, -bound_w, bound_w)
    if bias:
        bound_b = 1.0 / (in_features ** 0.5)
        b = jax.random.uniform(k_b, (out_features,), jnp.float32, -bound_b, bound_b)
    else:
        b = None
    return weight, b


if __name__ == "__main__":
    key = jax.random.PRNGKey(0)
    k_x, k_p = jax.random.split(key)

    batch, seq, in_features, out_features = 2, 8, 32, 64
    x = jax.random.normal(k_x, (batch, seq, in_features), jnp.float32)
    weight, b = init_linear_params(k_p, in_features, out_features, bias=True)
    y_ref = x @ weight.T + b

    # 1) Exact f32 path, PyTorch (N, K) weight layout, with bias.
    y = jax.block_until_ready(linear_forward(x, weight, b))
    assert y.shape == (batch, seq, out_features)
    assert jnp.allclose(y, y_ref, atol=1e-5, rtol=1e-5)

    # 2) f32 path, no bias.
    y_nb = jax.block_until_ready(linear_forward(x, weight, None))
    assert jnp.allclose(y_nb, x @ weight.T, atol=1e-5, rtol=1e-5)

    # 3) Recommended fast path: one-time persistent bf16 cast + (K, N)
    #    pre-transpose (done once at init, reused every call).
    w_fast = prepare_weight(weight)  # bf16, (in_features, out_features)
    y_fast = jax.block_until_ready(
        linear_forward(x, w_fast, b, weight_layout="kn"))
    assert y_fast.shape == (batch, seq, out_features)
    assert jnp.allclose(y_fast, y_ref, atol=5e-2, rtol=5e-2)

    print("KERNEL_OK")
</pallas_src>

<mosaic_0001>
module attributes {stable_mosaic.version = 11 : i64} {
  func.func @kernel(%arg0: i32, %arg1: i32, %arg2: i32, %arg3: memref<16x32xf32, #tpu.memory_space<vmem>>, %arg4: memref<64x32xf32, #tpu.memory_space<vmem>>, %arg5: memref<1x64xf32, #tpu.memory_space<vmem>>, %arg6: memref<16x64xf32, #tpu.memory_space<vmem>>) attributes {dimension_semantics = [#tpu.dimension_semantics<parallel>, #tpu.dimension_semantics<parallel>, #tpu.dimension_semantics<arbitrary>], iteration_bounds = array<i64: 1, 1, 1>, scalar_prefetch = 0 : i64, scratch_operands = 0 : i64, tpu.core_type = #tpu.core_type<tc>, window_params = [{transform_indices = @transform_0, window_bounds = array<i64: 16, 32>}, {transform_indices = @transform_1, window_bounds = array<i64: 64, 32>}, {transform_indices = @transform_2, window_bounds = array<i64: 1, 64>}, {transform_indices = @transform_3, window_bounds = array<i64: 16, 64>}]} {
    %c0_i32 = arith.constant 0 : i32
    %0 = arith.cmpi eq, %arg2, %c0_i32 : i32
    %1 = arith.extui %0 : i1 to i32
    %c0_i32_0 = arith.constant 0 : i32
    %2 = arith.cmpi ne, %1, %c0_i32_0 : i32
    scf.if %2 {
      %cst_10 = arith.constant 0.000000e+00 : f32
      %12 = vector.broadcast %cst_10 : f32 to vector<16x64xf32>
      %c0_11 = arith.constant 0 : index
      %c0_12 = arith.constant 0 : index
      %13 = vector.load %arg6[%c0_11, %c0_12] : memref<16x64xf32, #tpu.memory_space<vmem>>, vector<16x64xf32>
      tpu.vector_store %arg6[%c0_11, %c0_12], %12 {strides = array<i32>} : memref<16x64xf32, #tpu.memory_space<vmem>>, vector<16x64xf32>,
    } else {
    }
    %c0 = arith.constant 0 : index
    %c0_1 = arith.constant 0 : index
    %3 = vector.load %arg6[%c0, %c0_1] : memref<16x64xf32, #tpu.memory_space<vmem>>, vector<16x64xf32>
    %c0_2 = arith.constant 0 : index
    %c0_3 = arith.constant 0 : index
    %4 = vector.load %arg3[%c0_2, %c0_3] : memref<16x32xf32, #tpu.memory_space<vmem>>, vector<16x32xf32>
    %c0_4 = arith.constant 0 : index
    %c0_5 = arith.constant 0 : index
    %5 = vector.load %arg4[%c0_4, %c0_5] : memref<64x32xf32, #tpu.memory_space<vmem>>, vector<64x32xf32>
    %cst = arith.constant dense<0.000000e+00> : vector<16x64xf32>
    %6 = tpu.matmul %4, %5, %cst {dimension_numbers = #tpu.dot_dimension_numbers<[1], [1], [0], [0], [0, 0, 1, 0], [], []>} : vector<16x32xf32>, vector<64x32xf32>, vector<16x64xf32> -> vector<16x64xf32>
    %7 = arith.addf %3, %6 : vector<16x64xf32>
    %c0_6 = arith.constant 0 : index
    %c0_7 = arith.constant 0 : index
    %8 = vector.load %arg6[%c0_6, %c0_7] : memref<16x64xf32, #tpu.memory_space<vmem>>, vector<16x64xf32>
    tpu.vector_store %arg6[%c0_6, %c0_7], %7 {strides = array<i32>} : memref<16x64xf32, #tpu.memory_space<vmem>>, vector<16x64xf32>,
    %c0_i32_8 = arith.constant 0 : i32
    %9 = arith.cmpi eq, %arg2, %c0_i32_8 : i32
    %10 = arith.extui %9 : i1 to i32
    %c0_i32_9 = arith.constant 0 : i32
    %11 = arith.cmpi ne, %10, %c0_i32_9 : i32
    scf.if %11 {
      %c0_10 = arith.constant 0 : index
      %c0_11 = arith.constant 0 : index
      %12 = vector.load %arg6[%c0_10, %c0_11] : memref<16x64xf32, #tpu.memory_space<vmem>>, vector<16x64xf32>
      %c0_12 = arith.constant 0 : index
      %c0_13 = arith.constant 0 : index
      %13 = vector.load %arg5[%c0_12, %c0_13] : memref<1x64xf32, #tpu.memory_space<vmem>>, vector<1x64xf32>
      %14 = vector.broadcast %13 : vector<1x64xf32> to vector<16x64xf32>
      %15 = arith.addf %12, %14 : vector<16x64xf32>
      %c0_14 = arith.constant 0 : index
      %c0_15 = arith.constant 0 : index
      %16 = vector.load %arg6[%c0_14, %c0_15] : memref<16x64xf32, #tpu.memory_space<vmem>>, vector<16x64xf32>
      tpu.vector_store %arg6[%c0_14, %c0_15], %15 {strides = array<i32>} : memref<16x64xf32, #tpu.memory_space<vmem>>, vector<16x64xf32>,
    } else {
    }
    return
  }
  func.func @transform_0(%arg0: i32, %arg1: i32, %arg2: i32) -> (i32, i32) {
    %c0_i32 = arith.constant 0 : i32
    return %arg0, %arg2 : i32, i32
  }
  func.func @transform_1(%arg0: i32, %arg1: i32, %arg2: i32) -> (i32, i32) {
    %c0_i32 = arith.constant 0 : i32
    return %arg1, %arg2 : i32, i32
  }
  func.func @transform_2(%arg0: i32, %arg1: i32, %arg2: i32) -> (i32, i32) {
    %c0_i32 = arith.constant 0 : i32
    %c0_i32_0 = arith.constant 0 : i32
    return %c0_i32, %arg1 : i32, i32
  }
  func.func @transform_3(%arg0: i32, %arg1: i32, %arg2: i32) -> (i32, i32) {
    %c0_i32 = arith.constant 0 : i32
    return %arg0, %arg1 : i32, i32
  }
}

</mosaic_0001>

<llo_original>
// kernel: tpu_custom_call.1
$region0: #{tpu_custom_call.1}
  #allocation0 [shape = 'u32[]', space=smem, size = 0x4, offset = 0x4, fixed_abs, tag = 'smem constant byte address 0x4 - core index']
  #allocation1 [shape = 'u32[144,128]{1,0:T(1,128)}', space=vmem, size = 0x12000, scoped, tag = 'internal scratch']
  %s0 = inlined_call_operand.vmem [shape: f32[16,32], index: 0, kind: input, shape index: {}]
  %s1 = inlined_call_operand.vmem [shape: f32[64,32], index: 1, kind: input, shape index: {}]
  %s2 = inlined_call_operand.vmem [shape: f32[1,64], index: 2, kind: input, shape index: {}]
  %s3 = inlined_call_operand.hbm [shape: f32[16,64], index: 3, kind: output, shape index: {}]
  %s4 = sld [smem:[#allocation0]]
  $region30: #{tpu_custom_call.1} parent=0
    _
  %s6 = ssub.s32 1, %s4
  %s7 = scalar_select 0, %s6, %s4
  $region1: #{tpu_custom_call.1} parent=0
    #allocation2 [shape = 'u8[8192]{0}', space=vmem, size = 0x2000, scoped, tag = 'output window, operand 0, single buffered']
    #allocation3 [shape = 's32[1]{0}', space=sflag, size = 0x4, scoped, tag = 'scoped memory for tpu_custom_call.1']
    %8 = vsyncpa [#allocation3], 0
    // Predicated region
    $region2: #{tpu_custom_call.1} parent=1 // pred_check
      _
    $region3: #{tpu_custom_call.1} parent=1 // pred_check_branch
      %10 = sbr.rel (0) target = $region5
    $region4: #{tpu_custom_call.1} parent=1 // pred_region
      _
    $region5: #{tpu_custom_call.1} parent=1 // pred_fallthru
      _
    // Predicated region
    $region6: #{tpu_custom_call.1} parent=1 // pred_check
      _
    $region7: #{tpu_custom_call.1} parent=1 // pred_check_branch
      %12 = sbr.rel (0) target = $region9
    $region8: #{tpu_custom_call.1} parent=1 // pred_region
      _
    $region9: #{tpu_custom_call.1} parent=1 // pred_fallthru
      _
    // Predicated region
    $region10: #{tpu_custom_call.1} parent=1 // pred_check
      _
    $region11: #{tpu_custom_call.1} parent=1 // pred_check_branch
      %14 = sbr.rel (0) target = $region13
    $region12: #{tpu_custom_call.1} parent=1 // pred_region
      _
    $region13: #{tpu_custom_call.1} parent=1 // pred_fallthru
      _
    %p15 = scmp.eq.s32.totalorder 0, 0
    // Predicated region
    $region14: #{tpu_custom_call.1} parent=1 // pred_check
      %p16 = pneg %p15
    $region15: #{tpu_custom_call.1} parent=1 // pred_check_branch
      %18 = sbr.rel (%p16) target = $region17
    $region16: #{tpu_custom_call.1} parent=1 // pred_region
      %vm19 = vcmask 523264
      %20 = vst.msk [vmem:[#allocation2] sm:$0xff] %vm19, 0.0
      %21 = vst.msk [vmem:[#allocation2 + $0x8] sm:$0xff] %vm19, 0.0
    $region17: #{tpu_custom_call.1} parent=1 // pred_fallthru
      _
    %v22 = vld [vmem:[#allocation2] sm:$0xff]
    %v23 = vld [vmem:[#allocation2 + $0x8] sm:$0xff]
    %v24 = vld [vmem:[%s0] sm:$0xff]
    %v25 = vld [vmem:[%s0 + $0x8] sm:$0xff]
    %v26 = vld [vmem:[%s1] sm:$0xff]
    %v27 = vld [vmem:[%s1 + $0x8] sm:$0xff]
    %v28 = vld [vmem:[%s1 + $0x10] sm:$0xff]
    %v29 = vld [vmem:[%s1 + $0x18] sm:$0xff]
    %v30 = vld [vmem:[%s1 + $0x20] sm:$0xff]
    %v31 = vld [vmem:[%s1 + $0x28] sm:$0xff]
    %v32 = vld [vmem:[%s1 + $0x30] sm:$0xff]
    %v33 = vld [vmem:[%s1 + $0x38] sm:$0xff]
    %vm34 = vcmask 261120
    %v36 = vsel %vm34, %v24, 0
    %v39 = vsel %vm34, %v25, 0
    %v42 = vsel %vm34, %v26, 0
    %v45 = vsel %vm34, %v27, 0
    %v48 = vsel %vm34, %v28, 0
    %v51 = vsel %vm34, %v29, 0
    %v54 = vsel %vm34, %v30, 0
    %v57 = vsel %vm34, %v31, 0
    %v60 = vsel %vm34, %v32, 0
    %v63 = vsel %vm34, %v33, 0
    %65 = vmatprep.subr.mxu0 0.0
    %66 = vmatpush1.xpose.msra.mxu0 0.0
    %67 = vmatprep.subr.mxu0 0.0
    %68 = vmatpush1.xpose.msra.mxu0 0.0
    %69 = vmatprep.subr.mxu0 0.0
    %70 = vmatpush1.xpose.msra.mxu0 0.0
    %71 = vmatprep.subr.mxu0 0.0
    %72 = vmatpush1.xpose.msra.mxu0 0.0
    %73 = vmatprep.subr.mxu0 0.0
    %74 = vmatpush1.xpose.msra.mxu0 0.0
    %75 = vmatprep.subr.mxu0 0.0
    %76 = vmatpush1.xpose.msra.mxu0 0.0
    %77 = vmatprep.subr.mxu0 0.0
    %78 = vmatpush1.xpose.msra.mxu0 0.0
    %79 = vmatprep.subr.mxu0 0.0
    %80 = vmatpush1.xpose.msra.mxu0 0.0
    %81 = vmatprep.subr.mxu0 0.0
    %82 = vmatpush1.xpose.msra.mxu0 %v63
    %83 = vmatprep.subr.mxu0 0.0
    %84 = vmatpush1.xpose.msra.mxu0 %v60
    %85 = vmatprep.subr.mxu0 0.0
    %86 = vmatpush1.xpose.msra.mxu0 %v57
    %87 = vmatprep.subr.mxu0 0.0
    %88 = vmatpush1.xpose.msra.mxu0 %v54
    %89 = vmatprep.subr.mxu0 0.0
    %90 = vmatpush1.xpose.msra.mxu0 %v51
    %91 = vmatprep.subr.mxu0 0.0
    %92 = vmatpush1.xpose.msra.mxu0 %v48
    %93 = vmatprep.subr.mxu0 0.0
    %94 = vmatpush1.xpose.msra.mxu0 %v45
    %95 = vmatprep.subr.mxu0 0.0
    %96 = vmatpush1.xpose.msra.mxu0 %v42
    %97 = vmatprep.subr.mxu0 0.0
    %98 = vmatpush2.xpose.msra.mxu0 0.0
    %99 = vmatprep.subr.mxu0 0.0
    %100 = vmatpush2.xpose.msra.mxu0 0.0
    %101 = vmatprep.subr.mxu0 0.0
    %102 = vmatpush2.xpose.msra.mxu0 0.0
    %103 = vmatprep.subr.mxu0 0.0
    %104 = vmatpush2.xpose.msra.mxu0 0.0
    %105 = vmatprep.subr.mxu0 0.0
    %106 = vmatpush2.xpose.msra.mxu0 0.0
    %107 = vmatprep.subr.mxu0 0.0
    %108 = vmatpush2.xpose.msra.mxu0 0.0
    %109 = vmatprep.subr.mxu0 0.0
    %110 = vmatpush2.xpose.msra.mxu0 0.0
    %111 = vmatprep.subr.mxu0 0.0
    %112 = vmatpush2.xpose.msra.mxu0 0.0
    %113 = vmatprep.subr.mxu0 0.0
    %114 = vmatpush2.xpose.msra.mxu0 0.0
    %115 = vmatprep.subr.mxu0 0.0
    %116 = vmatpush2.xpose.msra.mxu0 0.0
    %117 = vmatprep.subr.mxu0 0.0
    %118 = vmatpush2.xpose.msra.mxu0 0.0
    %119 = vmatprep.subr.mxu0 0.0
    %120 = vmatpush2.xpose.msra.mxu0 0.0
    %121 = vmatprep.subr.mxu0 0.0
    %122 = vmatpush2.xpose.msra.mxu0 0.0
    %123 = vmatprep.subr.mxu0 0.0
    %124 = vmatpush2.xpose.msra.mxu0 0.0
    %125 = vmatprep.subr.mxu0 0.0
    %126 = vmatpush2.xpose.msra.mxu0 0.0
    %127 = vmatprep.subr.mxu0 0.0
    %128 = vmatpush2.xpose.msra.mxu0 0.0
    %129 = vmatprep.mubr.f32.mxu0 0.0
    %130 = vmatmul.mubr.f32.gmra.mxu0 %v36
    %v131 = vpop.f32.mrf.mxu0
    %v132 = vadd.f32 0.0, %v131
    %v133 = vpop.f32.mrf.mxu0
    %134 = vmatprep.mubr.f32.mxu0 0.0
    %135 = vmatmul.mubr.f32.gmra.mxu0 %v39
    %v136 = vpop.f32.mrf.mxu0
    %v137 = vadd.f32 0.0, %v136
    %v138 = vpop.f32.mrf.mxu0
    %139 = vdwg.mxu0
    %v140 = vadd.f32 %v22, %v132
    %v141 = vadd.f32 %v23, %v137
    %vm142 = vcmask 523264
    %143 = vst.msk [vmem:[#allocation2] sm:$0xff] %vm142, %v140
    %144 = vst.msk [vmem:[#allocation2 + $0x8] sm:$0xff] %vm142, %v141
    // Predicated region
    $region18: #{tpu_custom_call.1} parent=1 // pred_check
      %p145 = pneg %p15
    $region19: #{tpu_custom_call.1} parent=1 // pred_check_branch
      %147 = sbr.rel (%p145) target = $region21
    $region20: #{tpu_custom_call.1} parent=1 // pred_region
      %v148 = vld [vmem:[#allocation2] sm:$0xff]
      %v149 = vld [vmem:[#allocation2 + $0x8] sm:$0xff]
      %v150 = vld [vmem:[%s2] sm:$0x1]
      %v152 = vlaneseq
      %v153 = vshrl.u32 %v152, 7
      %v154 = vsub.s32 0, %v153
      %v155 = vrot.slane %v150, %v154
      %v157 = vadd.f32 %v148, %v155
      %v158 = vadd.f32 %v149, %v155
      %159 = vst.msk [vmem:[#allocation2] sm:$0xff] %vm142, %v157
      %160 = vst.msk [vmem:[#allocation2 + $0x8] sm:$0xff] %vm142, %v158
    $region21: #{tpu_custom_call.1} parent=1 // pred_fallthru
      _
    // Predicated region
    $region22: #{tpu_custom_call.1} parent=1 // pred_check
      _
    $region23: #{tpu_custom_call.1} parent=1 // pred_check_branch
      %162 = sbr.rel (0) target = $region25
    $region24: #{tpu_custom_call.1} parent=1 // pred_region
      %s164 = ssub.s32 256, 256
      %165 = vsyncadd [#allocation3], %s164
      %s166 = sshll.u32 [#allocation2], 4
      %s167 = int_to_ptr.vmem [resolvable:$true] %s166
      %172 = dma.vmem_to_hbm [thread:$0]  %s167, 256, %s3, [#allocation3], 128, 128, 8
    $region25: #{tpu_custom_call.1} parent=1 // pred_fallthru
      _
    // Predicated region
    $region26: #{tpu_custom_call.1} parent=1 // pred_check
      _
    $region27: #{tpu_custom_call.1} parent=1 // pred_check_branch
      %174 = sbr.rel (0) target = $region29
    $region28: #{tpu_custom_call.1} parent=1 // pred_region
      %175 = dma.done [#allocation3], 256
    $region29: #{tpu_custom_call.1} parent=1 // pred_fallthru
      _
    %176 = vsyncpa [#allocation3], 1

</llo_original>
